<compile_context>
chip_gen: v7x
topology: tpu7x:2x2x1
jax: 0.10.0
libtpu: 0.0.40
codegen_flags: <defaults>
</compile_context>

<pallas_src>
import functools

import jax
import jax.numpy as jnp
from jax import lax
from jax.experimental import pallas as pl
from jax.experimental.pallas import tpu as pltpu


def _fc_kernel(x_ref, w1_ref, b1_ref, w2_ref, b2_ref, o_ref, *, output_num):
    # x_ref : [B, F]     f32   (flattened input; bf16 cast happens here, in-kernel)
    # w1_ref: [H, F]     bf16  (PyTorch [out, in] layout -- lane-dense, NOT transposed)
    # b1_ref: [1, H]     f32
    # w2_ref: [H, Opad]  f32   ([in, out] layout, output dim padded to 128 lanes)
    # b2_ref: [1, Opad]  f32
    # o_ref : [B, output_num]  f32
    x = x_ref[...].astype(jnp.bfloat16)

    # fc1: contract along F (dim 1 of both operands) -> [B, H]; f32 accumulation on MXU.
    h = lax.dot_general(
        x, w1_ref[...], (((1,), (1,)), ((), ())),
        preferred_element_type=jnp.float32)
    h = jnp.maximum(h + b1_ref[...], 0.0)          # bias + ReLU in f32

    # fc2: [B, H] @ [H, Opad] -> [B, Opad], f32 operands (tiny GEMM; f32 is free here).
    logits = jnp.dot(h, w2_ref[...], preferred_element_type=jnp.float32) + b2_ref[...]

    # log_softmax over dim=0 (the batch axis), matching F.log_softmax(x, dim=0).
    # Column-independent, so the zero-padded class columns cannot affect real ones.
    m = jnp.max(logits, axis=0, keepdims=True)
    z = logits - m
    lse = jnp.log(jnp.sum(jnp.exp(z), axis=0, keepdims=True))
    log_probs = z - lse

    # Store only the real classes -> no post-call slice dispatch in the wrapper.
    o_ref[...] = log_probs[:, :output_num].astype(o_ref.dtype)


def prepare_params(w1, b1, w2, b2):
    """One-time parameter prep (outside the hot path).

    fc1 weight keeps the PyTorch [out, in] layout (lane-dense F) cast to bf16.
    fc2 weight is re-laid-out once to [in, out_padded] = [H, Opad] in f32 (lane-dense,
    MXU-canonical RHS), with the class dimension zero-padded up to a multiple of 128.
    """
    output_num, hidden = w2.shape
    o_pad = max(128, pl.cdiv(output_num, 128) * 128)
    w2p = jnp.zeros((hidden, o_pad), jnp.float32).at[:, :output_num].set(
        w2.T.astype(jnp.float32))
    b2p = jnp.zeros((1, o_pad), jnp.float32).at[0, :output_num].set(
        b2.astype(jnp.float32))
    return dict(
        w1=w1.astype(jnp.bfloat16),                      # [H, F]   bf16
        b1=b1.reshape(1, -1).astype(jnp.float32),        # [1, H]   f32
        w2=w2p,                                          # [H, Opad] f32
        b2=b2p,                                          # [1, Opad] f32
        output_num=int(output_num),
    )


@functools.partial(jax.jit, static_argnames=("output_num",))
def _forward_impl(x_nchw, w1, b1, w2, b2, *, output_num):
    B = x_nchw.shape[0]
    x2d = x_nchw.reshape(B, -1)                          # f32; cast to bf16 in-kernel

    vmem = pl.BlockSpec(memory_space=pltpu.MemorySpace.VMEM)
    return pl.pallas_call(
        functools.partial(_fc_kernel, output_num=output_num),
        out_shape=jax.ShapeDtypeStruct((B, output_num), jnp.float32),
        in_specs=[vmem] * 5,
        out_specs=vmem,
    )(x2d, w1, b1, w2, b2)


def fully_connected_forward(x_nchw, params):
    """x_nchw: [B, C, H, W] float32 -> [B, output_num] float32 log-probs over dim=0."""
    return _forward_impl(
        x_nchw, params["w1"], params["b1"], params["w2"], params["b2"],
        output_num=params["output_num"])


def _reference_f32(x_nchw, w1, b1, w2, b2):
    # Pure-f32 PyTorch-equivalent reference.
    x = x_nchw.reshape(x_nchw.shape[0], -1)
    h = jnp.maximum(x @ w1.T + b1, 0.0)
    logits = h @ w2.T + b2
    return jax.nn.log_softmax(logits, axis=0)


def _reference_mixed(x_nchw, w1, b1, w2, b2):
    # Same operand quantization as the kernel: bf16 fc1 operands, f32 fc2 / epilogue.
    x = x_nchw.reshape(x_nchw.shape[0], -1).astype(jnp.bfloat16)
    h = jnp.maximum(
        jnp.dot(x, w1.astype(jnp.bfloat16).T, preferred_element_type=jnp.float32) + b1,
        0.0)
    logits = jnp.dot(h, w2.T, preferred_element_type=jnp.float32) + b2
    return jax.nn.log_softmax(logits, axis=0)


if __name__ == "__main__":
    # Small shapes consistent with the module: x = [2, 4, 16, 16] -> input_num = 1024
    B, C, H, W = 2, 4, 16, 16
    input_num = C * H * W
    hidden_size = 32
    output_num = 16

    key = jax.random.PRNGKey(0)
    kx, k1, k2, k3, k4 = jax.random.split(key, 5)

    x = jax.random.normal(kx, (B, C, H, W), dtype=jnp.float32)

    # Deterministic parameter init (PyTorch Linear shapes: weight [out, in], bias [out])
    bound1 = 1.0 / jnp.sqrt(input_num)
    w1 = jax.random.uniform(k1, (hidden_size, input_num), jnp.float32, -bound1, bound1)
    b1 = jax.random.uniform(k2, (hidden_size,), jnp.float32, -bound1, bound1)
    bound2 = 1.0 / jnp.sqrt(hidden_size)
    w2 = jax.random.uniform(k3, (output_num, hidden_size), jnp.float32, -bound2, bound2)
    b2 = jax.random.uniform(k4, (output_num,), jnp.float32, -bound2, bound2)

    params = prepare_params(w1, b1, w2, b2)

    out = fully_connected_forward(x, params)
    out = jax.block_until_ready(out)
    assert out.shape == (B, output_num)

    # Tight check vs a reference applying the same fc1 bf16 operand quantization.
    ref_mixed = _reference_mixed(x, w1, b1, w2, b2)
    assert jnp.allclose(out, ref_mixed, atol=1e-3, rtol=1e-3), "mismatch vs mixed ref"

    # Loose check vs the pure-f32 PyTorch-equivalent reference.
    ref_f32 = _reference_f32(x, w1, b1, w2, b2)
    assert jnp.allclose(out, ref_f32, atol=3e-2, rtol=3e-2), "mismatch vs f32 reference"

    print("KERNEL_OK")
</pallas_src>

<mosaic_0001>
module attributes {stable_mosaic.version = 11 : i64} {
  func.func @_fc_kernel(%arg0: memref<2x1024xf32, #tpu.memory_space<vmem>>, %arg1: memref<32x1024xbf16, #tpu.memory_space<vmem>>, %arg2: memref<1x32xf32, #tpu.memory_space<vmem>>, %arg3: memref<32x128xf32, #tpu.memory_space<vmem>>, %arg4: memref<1x128xf32, #tpu.memory_space<vmem>>, %arg5: memref<2x16xf32, #tpu.memory_space<vmem>>) attributes {dimension_semantics = [], scalar_prefetch = 0 : i64, scratch_operands = 0 : i64, tpu.core_type = #tpu.core_type<tc>} {
    %c0 = arith.constant 0 : index
    %c0_0 = arith.constant 0 : index
    %0 = vector.load %arg0[%c0, %c0_0] : memref<2x1024xf32, #tpu.memory_space<vmem>>, vector<2x1024xf32>
    %1 = arith.truncf %0 : vector<2x1024xf32> to vector<2x1024xbf16>
    %c0_1 = arith.constant 0 : index
    %c0_2 = arith.constant 0 : index
    %2 = vector.load %arg1[%c0_1, %c0_2] : memref<32x1024xbf16, #tpu.memory_space<vmem>>, vector<32x1024xbf16>
    %cst = arith.constant dense<0.000000e+00> : vector<2x32xf32>
    %3 = tpu.matmul %1, %2, %cst {dimension_numbers = #tpu.dot_dimension_numbers<[1], [1], [0], [0], [0, 0, 1, 0], [], []>} : vector<2x1024xbf16>, vector<32x1024xbf16>, vector<2x32xf32> -> vector<2x32xf32>
    %c0_3 = arith.constant 0 : index
    %c0_4 = arith.constant 0 : index
    %4 = vector.load %arg2[%c0_3, %c0_4] : memref<1x32xf32, #tpu.memory_space<vmem>>, vector<1x32xf32>
    %5 = vector.broadcast %4 : vector<1x32xf32> to vector<2x32xf32>
    %6 = arith.addf %3, %5 : vector<2x32xf32>
    %cst_5 = arith.constant 0.000000e+00 : f32
    %7 = vector.broadcast %cst_5 : f32 to vector<2x32xf32>
    %8 = arith.maximumf %6, %7 : vector<2x32xf32>
    %c0_6 = arith.constant 0 : index
    %c0_7 = arith.constant 0 : index
    %9 = vector.load %arg3[%c0_6, %c0_7] : memref<32x128xf32, #tpu.memory_space<vmem>>, vector<32x128xf32>
    %cst_8 = arith.constant dense<0.000000e+00> : vector<2x128xf32>
    %10 = tpu.matmul %8, %9, %cst_8 {dimension_numbers = #tpu.dot_dimension_numbers<[1], [0], [0], [1], [0, 0, 1, 1], [], []>} : vector<2x32xf32>, vector<32x128xf32>, vector<2x128xf32> -> vector<2x128xf32>
    %c0_9 = arith.constant 0 : index
    %c0_10 = arith.constant 0 : index
    %11 = vector.load %arg4[%c0_9, %c0_10] : memref<1x128xf32, #tpu.memory_space<vmem>>, vector<1x128xf32>
    %12 = vector.broadcast %11 : vector<1x128xf32> to vector<2x128xf32>
    %13 = arith.addf %10, %12 : vector<2x128xf32>
    %cst_11 = arith.constant dense<0xFF800000> : vector<128xf32>
    %14 = vector.multi_reduction <maximumf>, %13, %cst_11 [0] : vector<2x128xf32> to vector<128xf32>
    %15 = vector.shape_cast %14 : vector<128xf32> to vector<1x128xf32>
    %16 = vector.broadcast %15 : vector<1x128xf32> to vector<2x128xf32>
    %17 = arith.subf %13, %16 : vector<2x128xf32>
    %18 = math.exp %17 : vector<2x128xf32>
    %cst_12 = arith.constant dense<0.000000e+00> : vector<128xf32>
    %19 = vector.multi_reduction <add>, %18, %cst_12 [0] : vector<2x128xf32> to vector<128xf32>
    %20 = vector.shape_cast %19 : vector<128xf32> to vector<1x128xf32>
    %21 = math.log %20 : vector<1x128xf32>
    %22 = vector.broadcast %21 : vector<1x128xf32> to vector<2x128xf32>
    %23 = arith.subf %17, %22 : vector<2x128xf32>
    %24 = vector.extract_strided_slice %23 {offsets = [0, 0], sizes = [2, 16], strides = [1, 1]} : vector<2x128xf32> to vector<2x16xf32>
    %c0_13 = arith.constant 0 : index
    %c0_14 = arith.constant 0 : index
    %25 = vector.load %arg5[%c0_13, %c0_14] : memref<2x16xf32, #tpu.memory_space<vmem>>, vector<2x16xf32>
    tpu.vector_store %arg5[%c0_13, %c0_14], %24 {strides = array<i32>} : memref<2x16xf32, #tpu.memory_space<vmem>>, vector<2x16xf32>,
    return
  }
}

</mosaic_0001>

<llo_original>
// kernel: _forward_impl.1
$region0: #{_forward_impl.1}
  #allocation0 [shape = 'u32[]', space=smem, size = 0x4, offset = 0x4, fixed_abs, tag = 'smem constant byte address 0x4 - core index']
  #allocation1 [shape = 'u32[144,128]{1,0:T(1,128)}', space=vmem, size = 0x12000, scoped, tag = 'internal scratch']
  %s0 = inlined_call_operand.vmem [shape: f32[2,1024], index: 0, kind: input, shape index: {}]
  %s1 = inlined_call_operand.vmem [shape: bf16[32,1024], index: 1, kind: input, shape index: {}]
  %s2 = inlined_call_operand.vmem [shape: f32[1,32], index: 2, kind: input, shape index: {}]
  %s3 = inlined_call_operand.hbm [shape: f32[32,128], index: 3, kind: input, shape index: {}]
  %s4 = inlined_call_operand.vmem [shape: f32[1,128], index: 4, kind: input, shape index: {}]
  %s5 = inlined_call_operand.hbm [shape: f32[2,16], index: 5, kind: output, shape index: {}]
  %s6 = sld [smem:[#allocation0]]
  $region34: #{_forward_impl.1} parent=0
    _
  %s8 = ssub.s32 1, %s6
  %s9 = scalar_select 0, %s8, %s6
  $region1: #{_forward_impl.1} parent=0
    #allocation2 [shape = 'u8[16384]{0}', space=vmem, size = 0x4000, scoped, tag = 'input window, operand 3, single buffered']
    #allocation3 [shape = 's32[1]{0}', space=sflag, size = 0x4, scoped, tag = 'scoped memory for _forward_impl.1']
    #allocation4 [shape = 's32[1]{0}', space=sflag, size = 0x4, scoped, tag = 'scoped memory for _forward_impl.1']
    #allocation5 [shape = 'u8[1024]{0}', space=vmem, size = 0x400, scoped, tag = 'output window, operand 0, single buffered']
    %10 = vsyncpa [#allocation3], 0
    %11 = vsyncpa [#allocation4], 0
    // Predicated region
    $region2: #{_forward_impl.1} parent=1 // pred_check
      _
    $region3: #{_forward_impl.1} parent=1 // pred_check_branch
      %13 = sbr.rel (0) target = $region5
    $region4: #{_forward_impl.1} parent=1 // pred_region
      _
    $region5: #{_forward_impl.1} parent=1 // pred_fallthru
      _
    // Predicated region
    $region6: #{_forward_impl.1} parent=1 // pred_check
      _
    $region7: #{_forward_impl.1} parent=1 // pred_check_branch
      %15 = sbr.rel (0) target = $region9
    $region8: #{_forward_impl.1} parent=1 // pred_region
      _
    $region9: #{_forward_impl.1} parent=1 // pred_fallthru
      _
    // Predicated region
    $region10: #{_forward_impl.1} parent=1 // pred_check
      _
    $region11: #{_forward_impl.1} parent=1 // pred_check_branch
      %17 = sbr.rel (0) target = $region13
    $region12: #{_forward_impl.1} parent=1 // pred_region
      _
    $region13: #{_forward_impl.1} parent=1 // pred_fallthru
      _
    // Predicated region
    $region14: #{_forward_impl.1} parent=1 // pred_check
      _
    $region15: #{_forward_impl.1} parent=1 // pred_check_branch
      %19 = sbr.rel (0) target = $region17
    $region16: #{_forward_impl.1} parent=1 // pred_region
      %s21 = ssub.s32 512, 512
      %22 = vsyncadd [#allocation3], %s21
      %s23 = sshll.u32 [#allocation2], 4
      %s24 = int_to_ptr.vmem [resolvable:$true] %s23
      %29 = dma.hbm_to_vmem [thread:$0]  %s3, 512, %s24, [#allocation3], 128, 128, 8
    $region17: #{_forward_impl.1} parent=1 // pred_fallthru
      _
    // Predicated region
    $region18: #{_forward_impl.1} parent=1 // pred_check
      _
    $region19: #{_forward_impl.1} parent=1 // pred_check_branch
      %31 = sbr.rel (0) target = $region21
    $region20: #{_forward_impl.1} parent=1 // pred_region
      _
    $region21: #{_forward_impl.1} parent=1 // pred_fallthru
      _
    // Predicated region
    $region22: #{_forward_impl.1} parent=1 // pred_check
      _
    $region23: #{_forward_impl.1} parent=1 // pred_check_branch
      %33 = sbr.rel (0) target = $region25
    $region24: #{_forward_impl.1} parent=1 // pred_region
      %34 = dma.done [#allocation3], 512
    $region25: #{_forward_impl.1} parent=1 // pred_fallthru
      _
    %v36 = vld [vmem:[%s0] sm:$0xff]
    %v37 = vld [vmem:[%s0 + $0x8] sm:$0xff]
    %v40 = vcombine.high %v36, %v36
    %v42 = vunpack.c.l.s4 1983009808
    %v43 = vunpack.c.0.s8 %v42
    %v44 = vlaneseq
    %v45 = vshrl.u32 %v44, 7
    %v46 = vsub.s32 %v43, %v45
    %v47 = vrot.slane %v36, %v46
    %v49 = vunpack.c.l.s4 1983009808
    %v50 = vunpack.c.0.s8 %v49
    %v51 = vlaneseq
    %v52 = vshrl.u32 %v51, 7
    %v53 = vsub.s32 %v50, %v52
    %v54 = vrot.slane %v40, %v53
    %v55 = vcombine.high %v47, %v47
    %v56 = vcombine.high %v54, %v54
    %v57 = vcombine.high %v37, %v37
    %v59 = vunpack.c.l.s4 1983009808
    %v60 = vunpack.c.0.s8 %v59
    %v61 = vlaneseq
    %v62 = vshrl.u32 %v61, 7
    %v63 = vsub.s32 %v60, %v62
    %v64 = vrot.slane %v37, %v63
    %v66 = vunpack.c.l.s4 1983009808
    %v67 = vunpack.c.0.s8 %v66
    %v68 = vlaneseq
    %v69 = vshrl.u32 %v68, 7
    %v70 = vsub.s32 %v67, %v69
    %v71 = vrot.slane %v57, %v70
    %v72 = vcombine.high %v64, %v64
    %v73 = vcombine.high %v71, %v71
    %v82 = vpack.c.bf16 %v47, %v47
    %v83 = vpack.c.bf16 %v55, %v55
    %v84 = vpack.c.bf16 %v54, %v54
    %v85 = vpack.c.bf16 %v56, %v56
    %v86 = vpack.c.bf16 %v64, %v64
    %v87 = vpack.c.bf16 %v72, %v72
    %v88 = vpack.c.bf16 %v71, %v71
    %v89 = vpack.c.bf16 %v73, %v73
    %v90 = vld [vmem:[%s1] sm:$0xff]
    %v91 = vld [vmem:[%s1 + $0x8] sm:$0xff]
    %v92 = vld [vmem:[%s1 + $0x10] sm:$0xff]
    %v93 = vld [vmem:[%s1 + $0x18] sm:$0xff]
    %v94 = vld [vmem:[%s1 + $0x20] sm:$0xff]
    %v95 = vld [vmem:[%s1 + $0x28] sm:$0xff]
    %v96 = vld [vmem:[%s1 + $0x30] sm:$0xff]
    %v97 = vld [vmem:[%s1 + $0x38] sm:$0xff]
    %v98 = vld [vmem:[%s1 + $0x40] sm:$0xff]
    %v99 = vld [vmem:[%s1 + $0x48] sm:$0xff]
    %v100 = vld [vmem:[%s1 + $0x50] sm:$0xff]
    %v101 = vld [vmem:[%s1 + $0x58] sm:$0xff]
    %v102 = vld [vmem:[%s1 + $0x60] sm:$0xff]
    %v103 = vld [vmem:[%s1 + $0x68] sm:$0xff]
    %v104 = vld [vmem:[%s1 + $0x70] sm:$0xff]
    %v105 = vld [vmem:[%s1 + $0x78] sm:$0xff]
    %v106 = vld [vmem:[%s2] sm:$0x1]
    %v108 = vlaneseq
    %v109 = vshrl.u32 %v108, 7
    %v110 = vsub.s32 0, %v109
    %v111 = vrot.slane %v106, %v110
    %v129 = vunpack.c.l.b16 %v90
    %v130 = vunpack.c.h.b16 %v90
    %v131 = vunpack.c.l.b16 %v91
    %v132 = vunpack.c.h.b16 %v91
    %v133 = vunpack.c.l.b16 %v92
    %v134 = vunpack.c.h.b16 %v92
    %v135 = vunpack.c.l.b16 %v93
    %v136 = vunpack.c.h.b16 %v93
    %v137 = vunpack.c.l.b16 %v94
    %v138 = vunpack.c.h.b16 %v94
    %v139 = vunpack.c.l.b16 %v95
    %v140 = vunpack.c.h.b16 %v95
    %v141 = vunpack.c.l.b16 %v96
    %v142 = vunpack.c.h.b16 %v96
    %v143 = vunpack.c.l.b16 %v97
    %v144 = vunpack.c.h.b16 %v97
    %v145 = vunpack.c.l.b16 %v98
    %v146 = vunpack.c.h.b16 %v98
    %v147 = vunpack.c.l.b16 %v99
    %v148 = vunpack.c.h.b16 %v99
    %v149 = vunpack.c.l.b16 %v100
    %v150 = vunpack.c.h.b16 %v100
    %v151 = vunpack.c.l.b16 %v101
    %v152 = vunpack.c.h.b16 %v101
    %v153 = vunpack.c.l.b16 %v102
    %v154 = vunpack.c.h.b16 %v102
    %v155 = vunpack.c.l.b16 %v103
    %v156 = vunpack.c.h.b16 %v103
    %v157 = vunpack.c.l.b16 %v104
    %v158 = vunpack.c.h.b16 %v104
    %v159 = vunpack.c.l.b16 %v105
    %v160 = vunpack.c.h.b16 %v105
    %v161 = vpack.c.b16 %v137, %v129
    %v162 = vpack.c.b16 %v138, %v130
    %v163 = vpack.c.b16 %v139, %v131
    %v164 = vpack.c.b16 %v140, %v132
    %v165 = vpack.c.b16 %v141, %v133
    %v166 = vpack.c.b16 %v142, %v134
    %v167 = vpack.c.b16 %v143, %v135
    %v168 = vpack.c.b16 %v144, %v136
    %v169 = vpack.c.b16 %v153, %v145
    %v170 = vpack.c.b16 %v154, %v146
    %v171 = vpack.c.b16 %v155, %v147
    %v172 = vpack.c.b16 %v156, %v148
    %v173 = vpack.c.b16 %v157, %v149
    %v174 = vpack.c.b16 %v158, %v150
    %v175 = vpack.c.b16 %v159, %v151
    %v176 = vpack.c.b16 %v160, %v152
    %193 = vmatprep.subr.bf16.mxu0 %v162
    %194 = vmatpush1.bf16.xpose.msra.mxu0 %v161
    %195 = vmatprep.subr.bf16.mxu0 %v170
    %196 = vmatpush1.bf16.xpose.msra.mxu0 %v169
    %197 = vmatprep.subr.bf16.mxu0 0
    %198 = vmatpush1.bf16.xpose.msra.mxu0 0
    %199 = vmatprep.subr.bf16.mxu0 0
    %200 = vmatpush1.bf16.xpose.msra.mxu0 0
    %201 = vmatprep.subr.bf16.mxu0 0
    %202 = vmatpush1.bf16.xpose.msra.mxu0 0
    %203 = vmatprep.subr.bf16.mxu0 0
    %204 = vmatpush1.bf16.xpose.msra.mxu0 0
    %205 = vmatprep.subr.bf16.mxu0 0
    %206 = vmatpush1.bf16.xpose.msra.mxu0 0
    %207 = vmatprep.subr.bf16.mxu0 0
    %208 = vmatpush1.bf16.xpose.msra.mxu0 0
    %209 = vmatprep.subr.bf16.mxu0 0
    %210 = vmatpush1.bf16.xpose.msra.mxu0 0
    %211 = vmatprep.subr.bf16.mxu0 0
    %212 = vmatpush1.bf16.xpose.msra.mxu0 0
    %213 = vmatprep.subr.bf16.mxu0 0
    %214 = vmatpush1.bf16.xpose.msra.mxu0 0
    %215 = vmatprep.subr.bf16.mxu0 0
    %216 = vmatpush1.bf16.xpose.msra.mxu0 0
    %217 = vmatprep.subr.bf16.mxu0 0
    %218 = vmatpush1.bf16.xpose.msra.mxu0 0
    %219 = vmatprep.subr.bf16.mxu0 0
    %220 = vmatpush1.bf16.xpose.msra.mxu0 0
    %221 = vmatprep.subr.bf16.mxu0 0
    %222 = vmatpush1.bf16.xpose.msra.mxu0 0
    %223 = vmatprep.subr.bf16.mxu0 0
    %224 = vmatpush1.bf16.xpose.msra.mxu0 0
    %225 = vmatprep.mubr.bf16.mxu0 %v83
    %226 = vmatmul.mubr.bf16.gmra.mrb[0].mxu0 %v82
    %v227 = vpop.f32.mrb[0].mxu0
    %v228 = vadd.f32 %v111, %v227
    %v229 = vpop.f32.mrb[0].mxu0
    %v230 = vpop.f32.mrb[0].mxu0
    %v231 = vpop.f32.mrb[0].mxu0
    %232 = vdwg.mxu0
    %233 = vmatprep.subr.bf16.mxu0 %v164
    %234 = vmatpush1.bf16.xpose.msra.mxu0 %v163
    %235 = vmatprep.subr.bf16.mxu0 %v172
    %236 = vmatpush1.bf16.xpose.msra.mxu0 %v171
    %237 = vmatprep.subr.bf16.mxu0 0
    %238 = vmatpush1.bf16.xpose.msra.mxu0 0
    %239 = vmatprep.subr.bf16.mxu0 0
    %240 = vmatpush1.bf16.xpose.msra.mxu0 0
    %241 = vmatprep.subr.bf16.mxu0 0
    %242 = vmatpush1.bf16.xpose.msra.mxu0 0
    %243 = vmatprep.subr.bf16.mxu0 0
    %244 = vmatpush1.bf16.xpose.msra.mxu0 0
    %245 = vmatprep.subr.bf16.mxu0 0
    %246 = vmatpush1.bf16.xpose.msra.mxu0 0
    %247 = vmatprep.subr.bf16.mxu0 0
    %248 = vmatpush1.bf16.xpose.msra.mxu0 0
    %249 = vmatprep.subr.bf16.mxu0 0
    %250 = vmatpush1.bf16.xpose.msra.mxu0 0
    %251 = vmatprep.subr.bf16.mxu0 0
    %252 = vmatpush1.bf16.xpose.msra.mxu0 0
    %253 = vmatprep.subr.bf16.mxu0 0
    %254 = vmatpush1.bf16.xpose.msra.mxu0 0
    %255 = vmatprep.subr.bf16.mxu0 0
    %256 = vmatpush1.bf16.xpose.msra.mxu0 0
    %257 = vmatprep.subr.bf16.mxu0 0
    %258 = vmatpush1.bf16.xpose.msra.mxu0 0
    %259 = vmatprep.subr.bf16.mxu0 0
    %260 = vmatpush1.bf16.xpose.msra.mxu0 0
    %261 = vmatprep.subr.bf16.mxu0 0
    %262 = vmatpush1.bf16.xpose.msra.mxu0 0
    %263 = vmatprep.subr.bf16.mxu0 0
    %264 = vmatpush1.bf16.xpose.msra.mxu0 0
    %265 = vmatprep.mubr.bf16.mxu0 %v85
    %266 = vmatmul.mubr.bf16.gmra.mrb[0].mxu0 %v84
    %v267 = vpop.f32.mrb[0].mxu0
    %v268 = vadd.f32 %v228, %v267
    %v269 = vpop.f32.mrb[0].mxu0
    %v270 = vpop.f32.mrb[0].mxu0
    %v271 = vpop.f32.mrb[0].mxu0
    %272 = vdwg.mxu0
    %273 = vmatprep.subr.bf16.mxu0 %v166
    %274 = vmatpush1.bf16.xpose.msra.mxu0 %v165
    %275 = vmatprep.subr.bf16.mxu0 %v174
    %276 = vmatpush1.bf16.xpose.msra.mxu0 %v173
    %277 = vmatprep.subr.bf16.mxu0 0
    %278 = vmatpush1.bf16.xpose.msra.mxu0 0
    %279 = vmatprep.subr.bf16.mxu0 0
    %280 = vmatpush1.bf16.xpose.msra.mxu0 0
    %281 = vmatprep.subr.bf16.mxu0 0
    %282 = vmatpush1.bf16.xpose.msra.mxu0 0
    %283 = vmatprep.subr.bf16.mxu0 0
    %284 = vmatpush1.bf16.xpose.msra.mxu0 0
    %285 = vmatprep.subr.bf16.mxu0 0
    %286 = vmatpush1.bf16.xpose.msra.mxu0 0
    %287 = vmatprep.subr.bf16.mxu0 0
    %288 = vmatpush1.bf16.xpose.msra.mxu0 0
    %289 = vmatprep.subr.bf16.mxu0 0
    %290 = vmatpush1.bf16.xpose.msra.mxu0 0
    %291 = vmatprep.subr.bf16.mxu0 0
    %292 = vmatpush1.bf16.xpose.msra.mxu0 0
    %293 = vmatprep.subr.bf16.mxu0 0
    %294 = vmatpush1.bf16.xpose.msra.mxu0 0
    %295 = vmatprep.subr.bf16.mxu0 0
    %296 = vmatpush1.bf16.xpose.msra.mxu0 0
    %297 = vmatprep.subr.bf16.mxu0 0
    %298 = vmatpush1.bf16.xpose.msra.mxu0 0
    %299 = vmatprep.subr.bf16.mxu0 0
    %300 = vmatpush1.bf16.xpose.msra.mxu0 0
    %301 = vmatprep.subr.bf16.mxu0 0
    %302 = vmatpush1.bf16.xpose.msra.mxu0 0
    %303 = vmatprep.subr.bf16.mxu0 0
    %304 = vmatpush1.bf16.xpose.msra.mxu0 0
    %305 = vmatprep.mubr.bf16.mxu0 %v87
    %306 = vmatmul.mubr.bf16.gmra.mrb[0].mxu0 %v86
    %v307 = vpop.f32.mrb[0].mxu0
    %v308 = vadd.f32 %v268, %v307
    %v309 = vpop.f32.mrb[0].mxu0
    %v310 = vpop.f32.mrb[0].mxu0
    %v311 = vpop.f32.mrb[0].mxu0
    %312 = vdwg.mxu0
    %313 = vmatprep.subr.bf16.mxu0 %v168
    %314 = vmatpush1.bf16.xpose.msra.mxu0 %v167
    %315 = vmatprep.subr.bf16.mxu0 %v176
    %316 = vmatpush1.bf16.xpose.msra.mxu0 %v175
    %317 = vmatprep.subr.bf16.mxu0 0
    %318 = vmatpush1.bf16.xpose.msra.mxu0 0
    %319 = vmatprep.subr.bf16.mxu0 0
    %320 = vmatpush1.bf16.xpose.msra.mxu0 0
    %321 = vmatprep.subr.bf16.mxu0 0
    %322 = vmatpush1.bf16.xpose.msra.mxu0 0
    %323 = vmatprep.subr.bf16.mxu0 0
    %324 = vmatpush1.bf16.xpose.msra.mxu0 0
    %325 = vmatprep.subr.bf16.mxu0 0
    %326 = vmatpush1.bf16.xpose.msra.mxu0 0
    %327 = vmatprep.subr.bf16.mxu0 0
    %328 = vmatpush1.bf16.xpose.msra.mxu0 0
    %329 = vmatprep.subr.bf16.mxu0 0
    %330 = vmatpush1.bf16.xpose.msra.mxu0 0
    %331 = vmatprep.subr.bf16.mxu0 0
    %332 = vmatpush1.bf16.xpose.msra.mxu0 0
    %333 = vmatprep.subr.bf16.mxu0 0
    %334 = vmatpush1.bf16.xpose.msra.mxu0 0
    %335 = vmatprep.subr.bf16.mxu0 0
    %336 = vmatpush1.bf16.xpose.msra.mxu0 0
    %337 = vmatprep.subr.bf16.mxu0 0
    %338 = vmatpush1.bf16.xpose.msra.mxu0 0
    %339 = vmatprep.subr.bf16.mxu0 0
    %340 = vmatpush1.bf16.xpose.msra.mxu0 0
    %341 = vmatprep.subr.bf16.mxu0 0
    %342 = vmatpush1.bf16.xpose.msra.mxu0 0
    %343 = vmatprep.subr.bf16.mxu0 0
    %344 = vmatpush1.bf16.xpose.msra.mxu0 0
    %345 = vmatprep.mubr.bf16.mxu0 %v89
    %346 = vmatmul.mubr.bf16.gmra.mrb[0].mxu0 %v88
    %v347 = vpop.f32.mrb[0].mxu0
    %v348 = vadd.f32 %v308, %v347
    %v349 = vpop.f32.mrb[0].mxu0
    %v350 = vpop.f32.mrb[0].mxu0
    %v351 = vpop.f32.mrb[0].mxu0
    %352 = vdwg.mxu0
    %v353 = vmax.f32 %v348, 0.0
    %v354 = vld [vmem:[#allocation2] sm:$0xff]
    %v355 = vld [vmem:[#allocation2 + $0x8] sm:$0xff]
    %v356 = vld [vmem:[#allocation2 + $0x10] sm:$0xff]
    %v357 = vld [vmem:[#allocation2 + $0x18] sm:$0xff]
    %v358 = vld [vmem:[%s4] sm:$0x1]
    %v360 = vlaneseq
    %v361 = vshrl.u32 %v360, 7
    %v362 = vsub.s32 0, %v361
    %v363 = vrot.slane %v358, %v362
    %vm365 = vcmask 261120
    %v367 = vsel %vm365, %v353, 0
    %369 = vmatprep.subr.mxu0 0.0
    %370 = vmatpush1.msra.mxu0 %v354
    %371 = vmatprep.subr.mxu0 0.0
    %372 = vmatpush1.msra.mxu0 %v355
    %373 = vmatprep.subr.mxu0 0.0
    %374 = vmatpush1.msra.mxu0 %v356
    %375 = vmatprep.subr.mxu0 0.0
    %376 = vmatpush1.msra.mxu0 %v357
    %377 = vmatprep.subr.mxu0 0.0
    %378 = vmatpush1.msra.mxu0 0.0
    %379 = vmatprep.subr.mxu0 0.0
    %380 = vmatpush1.msra.mxu0 0.0
    %381 = vmatprep.subr.mxu0 0.0
    %382 = vmatpush1.msra.mxu0 0.0
    %383 = vmatprep.subr.mxu0 0.0
    %384 = vmatpush1.msra.mxu0 0.0
    %385 = vmatprep.subr.mxu0 0.0
    %386 = vmatpush1.msra.mxu0 0.0
    %387 = vmatprep.subr.mxu0 0.0
    %388 = vmatpush1.msra.mxu0 0.0
    %389 = vmatprep.subr.mxu0 0.0
    %390 = vmatpush1.msra.mxu0 0.0
    %391 = vmatprep.subr.mxu0 0.0
    %392 = vmatpush1.msra.mxu0 0.0
    %393 = vmatprep.subr.mxu0 0.0
    %394 = vmatpush1.msra.mxu0 0.0
    %395 = vmatprep.subr.mxu0 0.0
    %396 = vmatpush1.msra.mxu0 0.0
    %397 = vmatprep.subr.mxu0 0.0
    %398 = vmatpush1.msra.mxu0 0.0
    %399 = vmatprep.subr.mxu0 0.0
    %400 = vmatpush1.msra.mxu0 0.0
    %401 = vmatprep.subr.mxu0 0.0
    %402 = vmatpush1.msra.mxu0 0.0
    %403 = vmatprep.subr.mxu0 0.0
    %404 = vmatpush1.msra.mxu0 0.0
    %405 = vmatprep.subr.mxu0 0.0
    %406 = vmatpush1.msra.mxu0 0.0
    %407 = vmatprep.subr.mxu0 0.0
    %408 = vmatpush1.msra.mxu0 0.0
    %409 = vmatprep.subr.mxu0 0.0
    %410 = vmatpush1.msra.mxu0 0.0
    %411 = vmatprep.subr.mxu0 0.0
    %412 = vmatpush1.msra.mxu0 0.0
    %413 = vmatprep.subr.mxu0 0.0
    %414 = vmatpush1.msra.mxu0 0.0
    %415 = vmatprep.subr.mxu0 0.0
    %416 = vmatpush1.msra.mxu0 0.0
    %417 = vmatprep.subr.mxu0 0.0
    %418 = vmatpush1.msra.mxu0 0.0
    %419 = vmatprep.subr.mxu0 0.0
    %420 = vmatpush1.msra.mxu0 0.0
    %421 = vmatprep.subr.mxu0 0.0
    %422 = vmatpush1.msra.mxu0 0.0
    %423 = vmatprep.subr.mxu0 0.0
    %424 = vmatpush1.msra.mxu0 0.0
    %425 = vmatprep.subr.mxu0 0.0
    %426 = vmatpush1.msra.mxu0 0.0
    %427 = vmatprep.subr.mxu0 0.0
    %428 = vmatpush1.msra.mxu0 0.0
    %429 = vmatprep.subr.mxu0 0.0
    %430 = vmatpush1.msra.mxu0 0.0
    %431 = vmatprep.subr.mxu0 0.0
    %432 = vmatpush1.msra.mxu0 0.0
    %433 = vmatprep.mubr.f32.mxu0 0.0
    %434 = vmatmul.mubr.f32.gmra.mrb[0].mxu0 %v367
    %v435 = vpop.f32.mrb[0].mxu0
    %v436 = vadd.f32 %v363, %v435
    %v437 = vpop.f32.mrb[0].mxu0
    %438 = vdwg.mxu0
    %vm439 = vcmask 1041408
    %v440 = vsel %vm439, %v436, -inf
    %v441 = vrot.slane %v440, 4
    %v442 = vmax.f32 %v440, %v441
    %v443 = vrot.slane %v442, 2
    %v444 = vmax.f32 %v442, %v443
    %v445 = vrot.slane %v444, 1
    %v446 = vmax.f32 %v444, %v445
    %v447 = vsub.f32 %v436, %v446
    %v448 = vmul.f32 %v447, 1.442695
    %v449 = vpow.pop %v448
    %v450 = vsel %vm439, %v449, 0.0
    %v451 = vrot.slane %v450, 4
    %v452 = vadd.f32 %v450, %v451
    %v453 = vrot.slane %v452, 2
    %v454 = vadd.f32 %v452, %v453
    %v455 = vrot.slane %v454, 1
    %v456 = vadd.f32 %v454, %v455
    %v457 = vlog2.pop %v456
    %v458 = vmul.f32 %v457, 0.6931472
    %v459 = vsub.f32 %v447, %v458
    %vm460 = vcmask 123904
    %461 = vst.msk [vmem:[#allocation5] sm:$0x3] %vm460, %v459
    // Predicated region
    $region26: #{_forward_impl.1} parent=1 // pred_check
      _
    $region27: #{_forward_impl.1} parent=1 // pred_check_branch
      %463 = sbr.rel (0) target = $region29
    $region28: #{_forward_impl.1} parent=1 // pred_region
      %s465 = ssub.s32 32, 32
      %466 = vsyncadd [#allocation4], %s465
      %s468 = sshll.u32 [#allocation5], 4
      %s469 = int_to_ptr.vmem [resolvable:$true] %s468
      %471 = dma.vmem_to_hbm [thread:$0]  %s469, 32, %s5, [#allocation4]
    $region29: #{_forward_impl.1} parent=1 // pred_fallthru
      _
    // Predicated region
    $region30: #{_forward_impl.1} parent=1 // pred_check
      _
    $region31: #{_forward_impl.1} parent=1 // pred_check_branch
      %473 = sbr.rel (0) target = $region33
    $region32: #{_forward_impl.1} parent=1 // pred_region
      %474 = dma.done [#allocation4], 32
    $region33: #{_forward_impl.1} parent=1 // pred_fallthru
      _
    %475 = vsyncpa [#allocation3], 1
    %476 = vsyncpa [#allocation4], 1

</llo_original>
